<compile_context>
chip_gen: v7x
topology: tpu7x:2x2x1
jax: 0.10.0
libtpu: 0.0.40
codegen_flags: <defaults>
</compile_context>

<pallas_src>
import functools

import jax
import jax.numpy as jnp
from jax.experimental import pallas as pl
from jax.experimental.pallas import tpu as pltpu


def basic_block_kernel(x_ref, w1_ref, w2_ref, bias_ref, out_ref, *, H):
    # x_ref   : (M, WC)      f32   M = B_tile*H image rows stacked along M,
    #                              channels-last, (W, C) flattened to WC lanes
    # w*_ref  : (3*WC, WC)   bf16  fused banded conv weights, BN scale folded
    # bias_ref: (2, WC)      f32   folded BN biases [bias1; bias2], tiled over W
    # out_ref : (M, WC)      f32
    M, WC = x_ref.shape

    x = x_ref[...]                                     # f32 (identity path)
    bias = bias_ref[...]                               # (2, WC) f32

    rmod = jax.lax.broadcasted_iota(jnp.int32, (M, WC), 0) % H
    top = rmod == 0                                    # first row of each image
    bot = rmod == H - 1                                # last  row of each image

    def conv3x3(inp_f32, w_ref):
        """3x3 conv (stride 1, pad 1) as ONE banded MXU matmul with K=3*WC.

        out[y] = w_ky0 . in[y-1] + w_ky1 . in[y] + w_ky2 . in[y+1]
        (kx taps and x-direction zero padding are folded into the banded
        weight matrix; y-direction padding handled by the border masks.)
        """
        prev = jnp.where(top, 0.0, pltpu.roll(inp_f32, shift=1, axis=0))
        nxt = jnp.where(bot, 0.0, pltpu.roll(inp_f32, shift=M - 1, axis=0))
        lhs = jnp.concatenate(
            [prev.astype(jnp.bfloat16),
             inp_f32.astype(jnp.bfloat16),
             nxt.astype(jnp.bfloat16)], axis=1)        # (M, 3*WC)
        return jnp.dot(lhs, w_ref[...], preferred_element_type=jnp.float32)

    out1 = jnp.maximum(conv3x3(x, w1_ref) + bias[0:1], 0.0)   # conv1+bn1+relu
    out2 = conv3x3(out1, w2_ref) + bias[1:2]                  # conv2+bn2
    out_ref[...] = jnp.maximum(out2 + x, 0.0).astype(out_ref.dtype)  # +id, relu


def _fold_conv_bn(w_oihw, bn, W, eps):
    """PyTorch (Cout, Cin, 3, 3) conv weight + eval-mode BN -> fused banded
    matrix (3*W*Cin, W*Cout) bf16 (kx taps, x-padding and BN scale folded in)
    and the remaining per-position bias (W*Cout,) f32."""
    gamma, beta, mean, var = bn
    scale = gamma / jnp.sqrt(var + eps)                    # (Cout,)
    bias = beta - mean * scale                             # (Cout,)

    cout, cin, _, _ = w_oihw.shape
    w = jnp.transpose(w_oihw, (2, 3, 1, 0))                # (kH, kW, Cin, Cout)
    xin = jnp.arange(W)[:, None]
    xout = jnp.arange(W)[None, :]
    kx = xin - xout + 1                                    # tap index, (W, W)
    valid = (kx >= 0) & (kx <= 2)
    kxc = jnp.clip(kx, 0, 2)
    scale_t = jnp.tile(scale, W)                           # (W*Cout,)

    mats = []
    for ky in range(3):
        blk = w[ky][kxc]                                   # (W, W, Cin, Cout)
        blk = jnp.where(valid[:, :, None, None], blk, 0.0)
        # banded[xin*Cin+ci, xout*Cout+co] = w[ky, xin-xout+1, ci, co]
        m = jnp.transpose(blk, (0, 2, 1, 3)).reshape(W * cin, W * cout)
        mats.append(m * scale_t[None, :])                  # fold BN scale
    w_fused = jnp.concatenate(mats, axis=0).astype(jnp.bfloat16)  # (3*WCin, WCout)
    return w_fused, jnp.tile(bias, W)


def basic_block_pallas(x_nchw, w1, bn1, w2, bn2, eps=1e-5):
    """x_nchw: (B, C, H, W) float32. Returns (B, C, H, W) float32."""
    B, C, H, W = x_nchw.shape
    WC = W * C
    # NCHW -> channels-last, images stacked along rows: (B*H, W*C) lane-dense.
    x = jnp.transpose(x_nchw, (0, 2, 3, 1)).reshape(B * H, WC)

    w1f, b1 = _fold_conv_bn(w1, bn1, W, eps)
    w2f, b2 = _fold_conv_bn(w2, bn2, W, eps)
    bias = jnp.stack([b1, b2])                             # (2, WC) f32

    # Chunk the batch so each grid step feeds the MXU a few hundred rows; for
    # small B this collapses to a single step.  Larger batches keep multiple
    # "parallel" steps so v7x's second TensorCore is used.
    rows_target = 256
    b_tile = max(1, min(B, rows_target // H))
    while B % b_tile != 0:
        b_tile -= 1
    m_tile = b_tile * H

    kernel = functools.partial(basic_block_kernel, H=H)

    out = pl.pallas_call(
        kernel,
        out_shape=jax.ShapeDtypeStruct((B * H, WC), x.dtype),
        grid_spec=pltpu.PrefetchScalarGridSpec(
            num_scalar_prefetch=0,
            grid=(B // b_tile,),
            in_specs=[
                pl.BlockSpec((m_tile, WC), lambda i: (i, 0)),
                pl.BlockSpec((3 * WC, WC), lambda i: (0, 0)),
                pl.BlockSpec((3 * WC, WC), lambda i: (0, 0)),
                pl.BlockSpec((2, WC), lambda i: (0, 0)),
            ],
            out_specs=pl.BlockSpec((m_tile, WC), lambda i: (i, 0)),
        ),
        compiler_params=pltpu.CompilerParams(
            dimension_semantics=("parallel",)),
    )(x, w1f, w2f, bias)

    return jnp.transpose(out.reshape(B, H, W, C), (0, 3, 1, 2))   # back to NCHW


def basic_block_reference(x, w1, bn1, w2, bn2, eps=1e-5):
    """Pure-JAX f32 reference (NCHW, PyTorch eval-mode semantics)."""
    def conv(a, w):
        return jax.lax.conv_general_dilated(
            a, w, window_strides=(1, 1), padding=((1, 1), (1, 1)),
            dimension_numbers=("NCHW", "OIHW", "NCHW"))

    def bn(a, p):
        gamma, beta, mean, var = p
        c = lambda v: v[None, :, None, None]
        return (a - c(mean)) / jnp.sqrt(c(var) + eps) * c(gamma) + c(beta)

    out = jax.nn.relu(bn(conv(x, w1), bn1))
    out = bn(conv(out, w2), bn2)
    return jax.nn.relu(out + x)


if __name__ == "__main__":
    # inplanes == planes (required since stride=1 and downsample=None).
    # W*C = 128 -> perfectly lane-dense rows; M = B*H = 32 rows per matmul.
    B, C, H, W = 2, 8, 16, 16

    key = jax.random.PRNGKey(0)
    ks = jax.random.split(key, 12)
    x = jax.random.normal(ks[0], (B, C, H, W), jnp.float32)

    w1 = jax.random.normal(ks[1], (C, C, 3, 3), jnp.float32) * 0.1
    w2 = jax.random.normal(ks[2], (C, C, 3, 3), jnp.float32) * 0.1

    # BatchNorm params (gamma, beta, running_mean, running_var), eval mode.
    bn1 = (jax.random.uniform(ks[3], (C,), jnp.float32, 0.5, 1.5),
           jax.random.normal(ks[4], (C,), jnp.float32) * 0.1,
           jax.random.normal(ks[5], (C,), jnp.float32) * 0.1,
           jax.random.uniform(ks[6], (C,), jnp.float32, 0.5, 1.5))
    bn2 = (jax.random.uniform(ks[7], (C,), jnp.float32, 0.5, 1.5),
           jax.random.normal(ks[8], (C,), jnp.float32) * 0.1,
           jax.random.normal(ks[9], (C,), jnp.float32) * 0.1,
           jax.random.uniform(ks[10], (C,), jnp.float32, 0.5, 1.5))

    out = jax.block_until_ready(basic_block_pallas(x, w1, bn1, w2, bn2))
    ref = jax.block_until_ready(basic_block_reference(x, w1, bn1, w2, bn2))

    assert out.shape == (B, C, H, W)
    # bf16 MXU inputs (f32 accumulation) -> tolerance loosened vs pure-f32.
    max_err = float(jnp.max(jnp.abs(out - ref)))
    assert jnp.allclose(out, ref, atol=5e-2, rtol=5e-2), max_err

    print("KERNEL_OK")
</pallas_src>

<mosaic_0001>
module attributes {stable_mosaic.version = 11 : i64} {
  func.func @basic_block_kernel(%arg0: i32, %arg1: memref<32x128xf32, #tpu.memory_space<vmem>>, %arg2: memref<384x128xbf16, #tpu.memory_space<vmem>>, %arg3: memref<384x128xbf16, #tpu.memory_space<vmem>>, %arg4: memref<2x128xf32, #tpu.memory_space<vmem>>, %arg5: memref<32x128xf32, #tpu.memory_space<vmem>>) attributes {dimension_semantics = [#tpu.dimension_semantics<parallel>], iteration_bounds = array<i64: 1>, scalar_prefetch = 0 : i64, scratch_operands = 0 : i64, tpu.core_type = #tpu.core_type<tc>, window_params = [{transform_indices = @transform_0, window_bounds = array<i64: 32, 128>}, {pipeline_mode = #tpu.pipeline_mode<synchronous>, transform_indices = @transform_1, window_bounds = array<i64: 384, 128>}, {pipeline_mode = #tpu.pipeline_mode<synchronous>, transform_indices = @transform_2, window_bounds = array<i64: 384, 128>}, {pipeline_mode = #tpu.pipeline_mode<synchronous>, transform_indices = @transform_3, window_bounds = array<i64: 2, 128>}, {transform_indices = @transform_4, window_bounds = array<i64: 32, 128>}]} {
    %c0 = arith.constant 0 : index
    %c0_0 = arith.constant 0 : index
    %0 = vector.load %arg1[%c0, %c0_0] : memref<32x128xf32, #tpu.memory_space<vmem>>, vector<32x128xf32>
    %c0_1 = arith.constant 0 : index
    %c0_2 = arith.constant 0 : index
    %1 = vector.load %arg4[%c0_1, %c0_2] : memref<2x128xf32, #tpu.memory_space<vmem>>, vector<2x128xf32>
    %2 = tpu.iota {dimensions = array<i32: 0>} : vector<32x128xi32>
    %c16_i32 = arith.constant 16 : i32
    %c0_i32 = arith.constant 0 : i32
    %3 = arith.cmpi eq, %c16_i32, %c0_i32 : i32
    %c1_i32 = arith.constant 1 : i32
    %4 = arith.select %3, %c1_i32, %c16_i32 : i32
    %5 = vector.broadcast %4 : i32 to vector<32x128xi32>
    %6 = arith.remsi %2, %5 : vector<32x128xi32>
    %c0_i32_3 = arith.constant 0 : i32
    %7 = vector.broadcast %c0_i32_3 : i32 to vector<32x128xi32>
    %8 = arith.cmpi ne, %6, %7 : vector<32x128xi32>
    %c0_i32_4 = arith.constant 0 : i32
    %9 = vector.broadcast %c0_i32_4 : i32 to vector<32x128xi32>
    %10 = arith.cmpi slt, %6, %9 : vector<32x128xi32>
    %c0_i32_5 = arith.constant 0 : i32
    %11 = arith.cmpi slt, %4, %c0_i32_5 : i32
    %12 = vector.broadcast %11 : i1 to vector<32x128xi1>
    %13 = vector.broadcast %12 : vector<32x128xi1> to vector<32x128xi1>
    %14 = arith.xori %10, %13 : vector<32x128xi1>
    %15 = arith.andi %14, %8 : vector<32x128xi1>
    %16 = vector.broadcast %4 : i32 to vector<32x128xi32>
    %17 = arith.addi %6, %16 : vector<32x128xi32>
    %18 = arith.select %15, %17, %6 : vector<32x128xi1>, vector<32x128xi32>
    %c0_i32_6 = arith.constant 0 : i32
    %19 = vector.broadcast %c0_i32_6 : i32 to vector<32x128xi32>
    %20 = arith.cmpi eq, %18, %19 : vector<32x128xi32>
    %c15_i32 = arith.constant 15 : i32
    %21 = vector.broadcast %c15_i32 : i32 to vector<32x128xi32>
    %22 = arith.cmpi eq, %18, %21 : vector<32x128xi32>
    %c1_i32_7 = arith.constant 1 : i32
    %23 = tpu.dynamic_rotate %0 by %c1_i32_7 dim 0 : vector<32x128xf32>, i32 -> vector<32x128xf32>
    %cst = arith.constant 0.000000e+00 : f32
    %24 = vector.broadcast %cst : f32 to vector<32x128xf32>
    %25 = arith.select %20, %24, %23 : vector<32x128xi1>, vector<32x128xf32>
    %c31_i32 = arith.constant 31 : i32
    %26 = tpu.dynamic_rotate %0 by %c31_i32 dim 0 : vector<32x128xf32>, i32 -> vector<32x128xf32>
    %cst_8 = arith.constant 0.000000e+00 : f32
    %27 = vector.broadcast %cst_8 : f32 to vector<32x128xf32>
    %28 = arith.select %22, %27, %26 : vector<32x128xi1>, vector<32x128xf32>
    %29 = arith.truncf %25 : vector<32x128xf32> to vector<32x128xbf16>
    %30 = arith.truncf %0 : vector<32x128xf32> to vector<32x128xbf16>
    %31 = arith.truncf %28 : vector<32x128xf32> to vector<32x128xbf16>
    %32 = tpu.concatenate %29, %30, %31 in 1 : vector<32x128xbf16>, vector<32x128xbf16>, vector<32x128xbf16> -> vector<32x384xbf16>
    %c0_9 = arith.constant 0 : index
    %c0_10 = arith.constant 0 : index
    %33 = vector.load %arg2[%c0_9, %c0_10] : memref<384x128xbf16, #tpu.memory_space<vmem>>, vector<384x128xbf16>
    %cst_11 = arith.constant dense<0.000000e+00> : vector<32x128xf32>
    %34 = tpu.matmul %32, %33, %cst_11 {dimension_numbers = #tpu.dot_dimension_numbers<[1], [0], [0], [1], [0, 0, 1, 1], [], []>} : vector<32x384xbf16>, vector<384x128xbf16>, vector<32x128xf32> -> vector<32x128xf32>
    %35 = vector.extract_strided_slice %1 {offsets = [0, 0], sizes = [1, 128], strides = [1, 1]} : vector<2x128xf32> to vector<1x128xf32>
    %36 = vector.broadcast %35 : vector<1x128xf32> to vector<32x128xf32>
    %37 = arith.addf %34, %36 : vector<32x128xf32>
    %cst_12 = arith.constant 0.000000e+00 : f32
    %38 = vector.broadcast %cst_12 : f32 to vector<32x128xf32>
    %39 = arith.maximumf %37, %38 : vector<32x128xf32>
    %c1_i32_13 = arith.constant 1 : i32
    %40 = tpu.dynamic_rotate %39 by %c1_i32_13 dim 0 : vector<32x128xf32>, i32 -> vector<32x128xf32>
    %cst_14 = arith.constant 0.000000e+00 : f32
    %41 = vector.broadcast %cst_14 : f32 to vector<32x128xf32>
    %42 = arith.select %20, %41, %40 : vector<32x128xi1>, vector<32x128xf32>
    %c31_i32_15 = arith.constant 31 : i32
    %43 = tpu.dynamic_rotate %39 by %c31_i32_15 dim 0 : vector<32x128xf32>, i32 -> vector<32x128xf32>
    %cst_16 = arith.constant 0.000000e+00 : f32
    %44 = vector.broadcast %cst_16 : f32 to vector<32x128xf32>
    %45 = arith.select %22, %44, %43 : vector<32x128xi1>, vector<32x128xf32>
    %46 = arith.truncf %42 : vector<32x128xf32> to vector<32x128xbf16>
    %47 = arith.truncf %39 : vector<32x128xf32> to vector<32x128xbf16>
    %48 = arith.truncf %45 : vector<32x128xf32> to vector<32x128xbf16>
    %49 = tpu.concatenate %46, %47, %48 in 1 : vector<32x128xbf16>, vector<32x128xbf16>, vector<32x128xbf16> -> vector<32x384xbf16>
    %c0_17 = arith.constant 0 : index
    %c0_18 = arith.constant 0 : index
    %50 = vector.load %arg3[%c0_17, %c0_18] : memref<384x128xbf16, #tpu.memory_space<vmem>>, vector<384x128xbf16>
    %cst_19 = arith.constant dense<0.000000e+00> : vector<32x128xf32>
    %51 = tpu.matmul %49, %50, %cst_19 {dimension_numbers = #tpu.dot_dimension_numbers<[1], [0], [0], [1], [0, 0, 1, 1], [], []>} : vector<32x384xbf16>, vector<384x128xbf16>, vector<32x128xf32> -> vector<32x128xf32>
    %52 = vector.extract_strided_slice %1 {offsets = [1, 0], sizes = [1, 128], strides = [1, 1]} : vector<2x128xf32> to vector<1x128xf32>
    %53 = vector.broadcast %52 : vector<1x128xf32> to vector<32x128xf32>
    %54 = arith.addf %51, %53 : vector<32x128xf32>
    %55 = arith.addf %54, %0 : vector<32x128xf32>
    %cst_20 = arith.constant 0.000000e+00 : f32
    %56 = vector.broadcast %cst_20 : f32 to vector<32x128xf32>
    %57 = arith.maximumf %55, %56 : vector<32x128xf32>
    %c0_21 = arith.constant 0 : index
    %c0_22 = arith.constant 0 : index
    %58 = vector.load %arg5[%c0_21, %c0_22] : memref<32x128xf32, #tpu.memory_space<vmem>>, vector<32x128xf32>
    tpu.vector_store %arg5[%c0_21, %c0_22], %57 {strides = array<i32>} : memref<32x128xf32, #tpu.memory_space<vmem>>, vector<32x128xf32>,
    return
  }
  func.func @transform_0(%arg0: i32) -> (i32, i32) {
    %c0_i32 = arith.constant 0 : i32
    %c0_i32_0 = arith.constant 0 : i32
    return %arg0, %c0_i32 : i32, i32
  }
  func.func @transform_1(%arg0: i32) -> (i32, i32) {
    %c0_i32 = arith.constant 0 : i32
    %c0_i32_0 = arith.constant 0 : i32
    %c0_i32_1 = arith.constant 0 : i32
    return %c0_i32, %c0_i32_0 : i32, i32
  }
  func.func @transform_2(%arg0: i32) -> (i32, i32) {
    %c0_i32 = arith.constant 0 : i32
    %c0_i32_0 = arith.constant 0 : i32
    %c0_i32_1 = arith.constant 0 : i32
    return %c0_i32, %c0_i32_0 : i32, i32
  }
  func.func @transform_3(%arg0: i32) -> (i32, i32) {
    %c0_i32 = arith.constant 0 : i32
    %c0_i32_0 = arith.constant 0 : i32
    %c0_i32_1 = arith.constant 0 : i32
    return %c0_i32, %c0_i32_0 : i32, i32
  }
  func.func @transform_4(%arg0: i32) -> (i32, i32) {
    %c0_i32 = arith.constant 0 : i32
    %c0_i32_0 = arith.constant 0 : i32
    return %arg0, %c0_i32 : i32, i32
  }
}

</mosaic_0001>

<llo_original>
// kernel: tpu_custom_call.1
$region0: #{tpu_custom_call.1}
  #allocation0 [shape = 'u32[]', space=smem, size = 0x4, offset = 0x4, fixed_abs, tag = 'smem constant byte address 0x4 - core index']
  #allocation1 [shape = 'u32[144,128]{1,0:T(1,128)}', space=vmem, size = 0x12000, scoped, tag = 'internal scratch']
  %s0 = inlined_call_operand.hbm [shape: f32[32,128], index: 0, kind: input, shape index: {}]
  %s1 = inlined_call_operand.hbm [shape: bf16[384,128], index: 1, kind: input, shape index: {}]
  %s2 = inlined_call_operand.hbm [shape: bf16[384,128], index: 2, kind: input, shape index: {}]
  %s3 = inlined_call_operand.vmem [shape: f32[2,128], index: 3, kind: input, shape index: {}]
  %s4 = inlined_call_operand.hbm [shape: f32[32,128], index: 4, kind: output, shape index: {}]
  %s5 = sld [smem:[#allocation0]]
  $region38: #{tpu_custom_call.1} parent=0
    _
  %s7 = ssub.s32 1, %s5
  %s8 = scalar_select 0, %s7, %s5
  $region1: #{tpu_custom_call.1} parent=0
    #allocation2 [shape = 'u8[16384]{0}', space=vmem, size = 0x4000, scoped, tag = 'input window, operand 0, single buffered']
    #allocation3 [shape = 's32[1]{0}', space=sflag, size = 0x4, scoped, tag = 'scoped memory for tpu_custom_call.1']
    #allocation4 [shape = 's32[1]{0}', space=sflag, size = 0x4, scoped, tag = 'scoped memory for tpu_custom_call.1']
    #allocation5 [shape = 'u8[98304]{0}', space=vmem, size = 0x18000, scoped, tag = 'input window, operand 1, single buffered']
    #allocation6 [shape = 's32[1]{0}', space=sflag, size = 0x4, scoped, tag = 'scoped memory for tpu_custom_call.1']
    #allocation7 [shape = 'u8[98304]{0}', space=vmem, size = 0x18000, scoped, tag = 'input window, operand 2, single buffered']
    #allocation8 [shape = 'u8[16384]{0}', space=vmem, size = 0x4000, scoped, tag = 'output window, operand 0, single buffered']
    %9 = vsyncpa [#allocation3], 0
    %10 = vsyncpa [#allocation6], 0
    %11 = vsyncpa [#allocation4], 0
    // Predicated region
    $region2: #{tpu_custom_call.1} parent=1 // pred_check
      _
    $region3: #{tpu_custom_call.1} parent=1 // pred_check_branch
      %13 = sbr.rel (0) target = $region5
    $region4: #{tpu_custom_call.1} parent=1 // pred_region
      %s15 = ssub.s32 512, 512
      %16 = vsyncadd [#allocation3], %s15
      %s17 = sshll.u32 [#allocation2], 4
      %s18 = int_to_ptr.vmem [resolvable:$true] %s17
      %23 = dma.hbm_to_vmem [thread:$0]  %s0, 512, %s18, [#allocation3], 128, 128, 8
    $region5: #{tpu_custom_call.1} parent=1 // pred_fallthru
      _
    // Predicated region
    $region6: #{tpu_custom_call.1} parent=1 // pred_check
      _
    $region7: #{tpu_custom_call.1} parent=1 // pred_check_branch
      %25 = sbr.rel (0) target = $region9
    $region8: #{tpu_custom_call.1} parent=1 // pred_region
      %s27 = ssub.s32 3072, 3072
      %28 = vsyncadd [#allocation6], %s27
      %s29 = sshll.u32 [#allocation5], 4
      %s30 = int_to_ptr.vmem [resolvable:$true] %s29
      %35 = dma.hbm_to_vmem [thread:$0]  %s1, 3072, %s30, [#allocation6], 64, 64, 4
    $region9: #{tpu_custom_call.1} parent=1 // pred_fallthru
      _
    // Predicated region
    $region10: #{tpu_custom_call.1} parent=1 // pred_check
      _
    $region11: #{tpu_custom_call.1} parent=1 // pred_check_branch
      %37 = sbr.rel (0) target = $region13
    $region12: #{tpu_custom_call.1} parent=1 // pred_region
      %s39 = ssub.s32 3072, 3072
      %40 = vsyncadd [#allocation6], %s39
      %s41 = sshll.u32 [#allocation7], 4
      %s42 = int_to_ptr.vmem [resolvable:$true] %s41
      %47 = dma.hbm_to_vmem [thread:$0]  %s2, 3072, %s42, [#allocation6], 64, 64, 4
    $region13: #{tpu_custom_call.1} parent=1 // pred_fallthru
      _
    // Predicated region
    $region14: #{tpu_custom_call.1} parent=1 // pred_check
      _
    $region15: #{tpu_custom_call.1} parent=1 // pred_check_branch
      %49 = sbr.rel (0) target = $region17
    $region16: #{tpu_custom_call.1} parent=1 // pred_region
      _
    $region17: #{tpu_custom_call.1} parent=1 // pred_fallthru
      _
    // Predicated region
    $region18: #{tpu_custom_call.1} parent=1 // pred_check
      _
    $region19: #{tpu_custom_call.1} parent=1 // pred_check_branch
      %51 = sbr.rel (0) target = $region21
    $region20: #{tpu_custom_call.1} parent=1 // pred_region
      %52 = dma.done [#allocation3], 512
    $region21: #{tpu_custom_call.1} parent=1 // pred_fallthru
      _
    // Predicated region
    $region22: #{tpu_custom_call.1} parent=1 // pred_check
      _
    $region23: #{tpu_custom_call.1} parent=1 // pred_check_branch
      %54 = sbr.rel (0) target = $region25
    $region24: #{tpu_custom_call.1} parent=1 // pred_region
      %55 = dma.done [#allocation6], 3072
    $region25: #{tpu_custom_call.1} parent=1 // pred_fallthru
      _
    // Predicated region
    $region26: #{tpu_custom_call.1} parent=1 // pred_check
      _
    $region27: #{tpu_custom_call.1} parent=1 // pred_check_branch
      %57 = sbr.rel (0) target = $region29
    $region28: #{tpu_custom_call.1} parent=1 // pred_region
      %58 = dma.done [#allocation6], 3072
    $region29: #{tpu_custom_call.1} parent=1 // pred_fallthru
      _
    %v60 = vld [vmem:[#allocation2] sm:$0xff]
    %v61 = vld [vmem:[#allocation2 + $0x8] sm:$0xff]
    %v62 = vld [vmem:[#allocation2 + $0x10] sm:$0xff]
    %v63 = vld [vmem:[#allocation2 + $0x18] sm:$0xff]
    %v64 = vld [vmem:[%s3] sm:$0x3]
    %v65 = vlaneseq
    %v66 = vshrl.u32 %v65, 7
    %v67 = vadd.s32 %v66, 8
    %v68 = vadd.s32 %v66, 16
    %v69 = vadd.s32 %v66, 24
    %vm70 = vcmp.lt.s32.totalorder %v66, 0
    %v71 = vsub.s32 0, %v66
    %v72 = vsel %vm70, %v71, %v66
    %v73 = vshrl.u32 %v72, 4
    %v74 = vand.u32 %v72, 15
    %v75 = vsub.s32 0, %v74
    %v76 = vsel %vm70, %v75, %v74
    %vm77 = vcmp.lt.s32.totalorder %v67, 0
    %v78 = vsub.s32 0, %v67
    %v79 = vsel %vm77, %v78, %v67
    %v80 = vshrl.u32 %v79, 4
    %v81 = vand.u32 %v79, 15
    %v82 = vsub.s32 0, %v81
    %v83 = vsel %vm77, %v82, %v81
    %vm84 = vcmp.lt.s32.totalorder %v68, 0
    %v85 = vsub.s32 0, %v68
    %v86 = vsel %vm84, %v85, %v68
    %v87 = vshrl.u32 %v86, 4
    %v88 = vand.u32 %v86, 15
    %v89 = vsub.s32 0, %v88
    %v90 = vsel %vm84, %v89, %v88
    %vm91 = vcmp.lt.s32.totalorder %v69, 0
    %v92 = vsub.s32 0, %v69
    %v93 = vsel %vm91, %v92, %v69
    %v94 = vshrl.u32 %v93, 4
    %v95 = vand.u32 %v93, 15
    %v96 = vsub.s32 0, %v95
    %v97 = vsel %vm91, %v96, %v95
    %vm98 = vcmp.ne.s32.totalorder %v76, 0
    %vm99 = vcmp.ne.s32.totalorder %v83, 0
    %vm100 = vcmp.ne.s32.totalorder %v90, 0
    %vm101 = vcmp.ne.s32.totalorder %v97, 0
    %vm102 = vcmp.lt.s32.totalorder %v76, 0
    %vm103 = vcmp.lt.s32.totalorder %v83, 0
    %vm104 = vcmp.lt.s32.totalorder %v90, 0
    %vm105 = vcmp.lt.s32.totalorder %v97, 0
    %vm106 = vmand %vm102, %vm98
    %vm107 = vmand %vm103, %vm99
    %vm108 = vmand %vm104, %vm100
    %vm109 = vmand %vm105, %vm101
    %v110 = vadd.s32 %v76, 16
    %v111 = vadd.s32 %v83, 16
    %v112 = vadd.s32 %v90, 16
    %v113 = vadd.s32 %v97, 16
    %v114 = vsel %vm106, %v110, %v76
    %v115 = vsel %vm107, %v111, %v83
    %v116 = vsel %vm108, %v112, %v90
    %v117 = vsel %vm109, %v113, %v97
    %vm118 = vcmp.eq.s32.totalorder %v114, 0
    %vm119 = vcmp.eq.s32.totalorder %v115, 0
    %vm120 = vcmp.eq.s32.totalorder %v116, 0
    %vm121 = vcmp.eq.s32.totalorder %v117, 0
    %vm122 = vcmp.eq.s32.totalorder %v114, 15
    %vm123 = vcmp.eq.s32.totalorder %v115, 15
    %vm124 = vcmp.eq.s32.totalorder %v116, 15
    %vm125 = vcmp.eq.s32.totalorder %v117, 15
    %v126 = vrot.slane %v60, 7
    %v127 = vrot.slane %v61, 7
    %v128 = vrot.slane %v62, 7
    %v129 = vrot.slane %v63, 7
    %vm130 = vcmp.lt.s32.totalorder %v66, 1
    %v131 = vsel %vm130, %v128, %v129
    %v132 = vsel %vm130, %v127, %v128
    %v133 = vsel %vm130, %v126, %v127
    %v134 = vsel %vm130, %v129, %v126
    %v135 = vsel %vm118, 0.0, %v134
    %v136 = vsel %vm119, 0.0, %v133
    %v137 = vsel %vm120, 0.0, %v132
    %v138 = vsel %vm121, 0.0, %v131
    %v139 = vrot.slane %v60, 1
    %v140 = vrot.slane %v61, 1
    %v141 = vrot.slane %v62, 1
    %v142 = vrot.slane %v63, 1
    %vm143 = vcmp.lt.s32.totalorder %v66, 7
    %v144 = vsel %vm143, %v141, %v142
    %v145 = vsel %vm143, %v140, %v141
    %v146 = vsel %vm143, %v139, %v140
    %v147 = vsel %vm143, %v142, %v139
    %v148 = vsel %vm122, 0.0, %v146
    %v149 = vsel %vm123, 0.0, %v145
    %v150 = vsel %vm124, 0.0, %v144
    %v151 = vsel %vm125, 0.0, %v147
    %v152 = vpack.c.bf16 %v136, %v135
    %v153 = vpack.c.bf16 %v138, %v137
    %v154 = vpack.c.bf16 %v61, %v60
    %v155 = vpack.c.bf16 %v63, %v62
    %v156 = vpack.c.bf16 %v149, %v148
    %v157 = vpack.c.bf16 %v151, %v150
    %v158 = vld [vmem:[#allocation5] sm:$0xf]
    %v159 = vld [vmem:[#allocation5 + $0x4] sm:$0xf]
    %v160 = vld [vmem:[#allocation5 + $0x8] sm:$0xf]
    %v161 = vld [vmem:[#allocation5 + $0xc] sm:$0xf]
    %v162 = vld [vmem:[#allocation5 + $0x10] sm:$0xf]
    %v163 = vld [vmem:[#allocation5 + $0x14] sm:$0xf]
    %v164 = vld [vmem:[#allocation5 + $0x18] sm:$0xf]
    %v165 = vld [vmem:[#allocation5 + $0x1c] sm:$0xf]
    %v166 = vld [vmem:[#allocation5 + $0x20] sm:$0xf]
    %v167 = vld [vmem:[#allocation5 + $0x24] sm:$0xf]
    %v168 = vld [vmem:[#allocation5 + $0x28] sm:$0xf]
    %v169 = vld [vmem:[#allocation5 + $0x2c] sm:$0xf]
    %v170 = vld [vmem:[#allocation5 + $0x30] sm:$0xf]
    %v171 = vld [vmem:[#allocation5 + $0x34] sm:$0xf]
    %v172 = vld [vmem:[#allocation5 + $0x38] sm:$0xf]
    %v173 = vld [vmem:[#allocation5 + $0x3c] sm:$0xf]
    %v174 = vld [vmem:[#allocation5 + $0x40] sm:$0xf]
    %v175 = vld [vmem:[#allocation5 + $0x44] sm:$0xf]
    %v176 = vld [vmem:[#allocation5 + $0x48] sm:$0xf]
    %v177 = vld [vmem:[#allocation5 + $0x4c] sm:$0xf]
    %v178 = vld [vmem:[#allocation5 + $0x50] sm:$0xf]
    %v179 = vld [vmem:[#allocation5 + $0x54] sm:$0xf]
    %v180 = vld [vmem:[#allocation5 + $0x58] sm:$0xf]
    %v181 = vld [vmem:[#allocation5 + $0x5c] sm:$0xf]
    %v182 = vld [vmem:[#allocation5 + $0x60] sm:$0xf]
    %v183 = vld [vmem:[#allocation5 + $0x64] sm:$0xf]
    %v184 = vld [vmem:[#allocation5 + $0x68] sm:$0xf]
    %v185 = vld [vmem:[#allocation5 + $0x6c] sm:$0xf]
    %v186 = vld [vmem:[#allocation5 + $0x70] sm:$0xf]
    %v187 = vld [vmem:[#allocation5 + $0x74] sm:$0xf]
    %v188 = vld [vmem:[#allocation5 + $0x78] sm:$0xf]
    %v189 = vld [vmem:[#allocation5 + $0x7c] sm:$0xf]
    %v190 = vld [vmem:[#allocation5 + $0x80] sm:$0xf]
    %v191 = vld [vmem:[#allocation5 + $0x84] sm:$0xf]
    %v192 = vld [vmem:[#allocation5 + $0x88] sm:$0xf]
    %v193 = vld [vmem:[#allocation5 + $0x8c] sm:$0xf]
    %v194 = vld [vmem:[#allocation5 + $0x90] sm:$0xf]
    %v195 = vld [vmem:[#allocation5 + $0x94] sm:$0xf]
    %v196 = vld [vmem:[#allocation5 + $0x98] sm:$0xf]
    %v197 = vld [vmem:[#allocation5 + $0x9c] sm:$0xf]
    %v198 = vld [vmem:[#allocation5 + $0xa0] sm:$0xf]
    %v199 = vld [vmem:[#allocation5 + $0xa4] sm:$0xf]
    %v200 = vld [vmem:[#allocation5 + $0xa8] sm:$0xf]
    %v201 = vld [vmem:[#allocation5 + $0xac] sm:$0xf]
    %v202 = vld [vmem:[#allocation5 + $0xb0] sm:$0xf]
    %v203 = vld [vmem:[#allocation5 + $0xb4] sm:$0xf]
    %v204 = vld [vmem:[#allocation5 + $0xb8] sm:$0xf]
    %v205 = vld [vmem:[#allocation5 + $0xbc] sm:$0xf]
    %v206 = vlaneseq
    %v207 = vshrl.u32 %v206, 7
    %v208 = vsub.s32 0, %v207
    %v209 = vrot.slane %v64, %v208
    %v258 = vunpack.c.l.b16 %v158
    %v259 = vunpack.c.l.b16 %v159
    %v260 = vunpack.c.l.b16 %v160
    %v261 = vunpack.c.l.b16 %v161
    %v262 = vunpack.c.l.b16 %v162
    %v263 = vunpack.c.l.b16 %v163
    %v264 = vunpack.c.l.b16 %v164
    %v265 = vunpack.c.l.b16 %v165
    %v266 = vunpack.c.l.b16 %v166
    %v267 = vunpack.c.l.b16 %v167
    %v268 = vunpack.c.l.b16 %v168
    %v269 = vunpack.c.l.b16 %v169
    %v270 = vunpack.c.l.b16 %v170
    %v271 = vunpack.c.l.b16 %v171
    %v272 = vunpack.c.l.b16 %v172
    %v273 = vunpack.c.l.b16 %v173
    %v274 = vunpack.c.l.b16 %v174
    %v275 = vunpack.c.l.b16 %v175
    %v276 = vunpack.c.l.b16 %v176
    %v277 = vunpack.c.l.b16 %v177
    %v278 = vunpack.c.l.b16 %v178
    %v279 = vunpack.c.l.b16 %v179
    %v280 = vunpack.c.l.b16 %v180
    %v281 = vunpack.c.l.b16 %v181
    %v282 = vunpack.c.l.b16 %v182
    %v283 = vunpack.c.l.b16 %v183
    %v284 = vunpack.c.l.b16 %v184
    %v285 = vunpack.c.l.b16 %v185
    %v286 = vunpack.c.l.b16 %v186
    %v287 = vunpack.c.l.b16 %v187
    %v288 = vunpack.c.l.b16 %v188
    %v289 = vunpack.c.l.b16 %v189
    %v290 = vunpack.c.l.b16 %v190
    %v291 = vunpack.c.l.b16 %v191
    %v292 = vunpack.c.l.b16 %v192
    %v293 = vunpack.c.l.b16 %v193
    %v294 = vunpack.c.l.b16 %v194
    %v295 = vunpack.c.l.b16 %v195
    %v296 = vunpack.c.l.b16 %v196
    %v297 = vunpack.c.l.b16 %v197
    %v298 = vunpack.c.l.b16 %v198
    %v299 = vunpack.c.l.b16 %v199
    %v300 = vunpack.c.l.b16 %v200
    %v301 = vunpack.c.l.b16 %v201
    %v302 = vunpack.c.l.b16 %v202
    %v303 = vunpack.c.l.b16 %v203
    %v304 = vunpack.c.l.b16 %v204
    %v305 = vunpack.c.l.b16 %v205
    %v306 = vpack.c.b16 %v259, %v258
    %v307 = vpack.c.b16 %v261, %v260
    %v308 = vpack.c.b16 %v263, %v262
    %v309 = vpack.c.b16 %v265, %v264
    %v310 = vpack.c.b16 %v267, %v266
    %v311 = vpack.c.b16 %v269, %v268
    %v312 = vpack.c.b16 %v271, %v270
    %v313 = vpack.c.b16 %v273, %v272
    %v314 = vpack.c.b16 %v275, %v274
    %v315 = vpack.c.b16 %v277, %v276
    %v316 = vpack.c.b16 %v279, %v278
    %v317 = vpack.c.b16 %v281, %v280
    %v318 = vpack.c.b16 %v283, %v282
    %v319 = vpack.c.b16 %v285, %v284
    %v320 = vpack.c.b16 %v287, %v286
    %v321 = vpack.c.b16 %v289, %v288
    %v322 = vpack.c.b16 %v291, %v290
    %v323 = vpack.c.b16 %v293, %v292
    %v324 = vpack.c.b16 %v295, %v294
    %v325 = vpack.c.b16 %v297, %v296
    %v326 = vpack.c.b16 %v299, %v298
    %v327 = vpack.c.b16 %v301, %v300
    %v328 = vpack.c.b16 %v303, %v302
    %v329 = vpack.c.b16 %v305, %v304
    %354 = vmatprep.subr.bf16.mxu0 0
    %355 = vmatpush1.bf16.msra.mxu0 %v306
    %356 = vmatprep.subr.bf16.mxu0 0
    %357 = vmatpush1.bf16.msra.mxu0 %v307
    %358 = vmatprep.subr.bf16.mxu0 0
    %359 = vmatpush1.bf16.msra.mxu0 %v308
    %360 = vmatprep.subr.bf16.mxu0 0
    %361 = vmatpush1.bf16.msra.mxu0 %v309
    %362 = vmatprep.subr.bf16.mxu0 0
    %363 = vmatpush1.bf16.msra.mxu0 %v310
    %364 = vmatprep.subr.bf16.mxu0 0
    %365 = vmatpush1.bf16.msra.mxu0 %v311
    %366 = vmatprep.subr.bf16.mxu0 0
    %367 = vmatpush1.bf16.msra.mxu0 %v312
    %368 = vmatprep.subr.bf16.mxu0 0
    %369 = vmatpush1.bf16.msra.mxu0 %v313
    %370 = vmatprep.subr.bf16.mxu0 0
    %371 = vmatpush1.bf16.msra.mxu0 %v314
    %372 = vmatprep.subr.bf16.mxu0 0
    %373 = vmatpush1.bf16.msra.mxu0 %v315
    %374 = vmatprep.subr.bf16.mxu0 0
    %375 = vmatpush1.bf16.msra.mxu0 %v316
    %376 = vmatprep.subr.bf16.mxu0 0
    %377 = vmatpush1.bf16.msra.mxu0 %v317
    %378 = vmatprep.subr.bf16.mxu0 0
    %379 = vmatpush1.bf16.msra.mxu0 %v318
    %380 = vmatprep.subr.bf16.mxu0 0
    %381 = vmatpush1.bf16.msra.mxu0 %v319
    %382 = vmatprep.subr.bf16.mxu0 0
    %383 = vmatpush1.bf16.msra.mxu0 %v320
    %384 = vmatprep.subr.bf16.mxu0 0
    %385 = vmatpush1.bf16.msra.mxu0 %v321
    %386 = vmatprep.mubr.bf16.mxu0 %v154
    %387 = vmatmul.mubr.bf16.gmra.mrb[0].mxu0 %v152
    %v388 = vpop.f32.mrb[0].mxu0
    %v389 = vadd.f32 %v209, %v388
    %v390 = vpop.f32.mrb[0].mxu0
    %v391 = vpop.f32.mrb[0].mxu0
    %v392 = vadd.f32 %v209, %v391
    %v393 = vpop.f32.mrb[0].mxu0
    %394 = vmatprep.mubr.bf16.mxu0 %v155
    %395 = vmatmul.mubr.bf16.gmra.mrb[0].mxu0 %v153
    %v396 = vpop.f32.mrb[0].mxu0
    %v397 = vadd.f32 %v209, %v396
    %v398 = vpop.f32.mrb[0].mxu0
    %v399 = vpop.f32.mrb[0].mxu0
    %v400 = vadd.f32 %v209, %v399
    %v401 = vpop.f32.mrb[0].mxu0
    %402 = vdwg.mxu0
    %403 = vmatprep.subr.bf16.mxu0 0
    %404 = vmatpush1.bf16.msra.mxu0 %v322
    %405 = vmatprep.subr.bf16.mxu0 0
    %406 = vmatpush1.bf16.msra.mxu0 %v323
    %407 = vmatprep.subr.bf16.mxu0 0
    %408 = vmatpush1.bf16.msra.mxu0 %v324
    %409 = vmatprep.subr.bf16.mxu0 0
    %410 = vmatpush1.bf16.msra.mxu0 %v325
    %411 = vmatprep.subr.bf16.mxu0 0
    %412 = vmatpush1.bf16.msra.mxu0 %v326
    %413 = vmatprep.subr.bf16.mxu0 0
    %414 = vmatpush1.bf16.msra.mxu0 %v327
    %415 = vmatprep.subr.bf16.mxu0 0
    %416 = vmatpush1.bf16.msra.mxu0 %v328
    %417 = vmatprep.subr.bf16.mxu0 0
    %418 = vmatpush1.bf16.msra.mxu0 %v329
    %419 = vmatprep.subr.bf16.mxu0 0
    %420 = vmatpush1.bf16.msra.mxu0 0
    %421 = vmatprep.subr.bf16.mxu0 0
    %422 = vmatpush1.bf16.msra.mxu0 0
    %423 = vmatprep.subr.bf16.mxu0 0
    %424 = vmatpush1.bf16.msra.mxu0 0
    %425 = vmatprep.subr.bf16.mxu0 0
    %426 = vmatpush1.bf16.msra.mxu0 0
    %427 = vmatprep.subr.bf16.mxu0 0
    %428 = vmatpush1.bf16.msra.mxu0 0
    %429 = vmatprep.subr.bf16.mxu0 0
    %430 = vmatpush1.bf16.msra.mxu0 0
    %431 = vmatprep.subr.bf16.mxu0 0
    %432 = vmatpush1.bf16.msra.mxu0 0
    %433 = vmatprep.subr.bf16.mxu0 0
    %434 = vmatpush1.bf16.msra.mxu0 0
    %435 = vmatprep.mubr.bf16.mxu0 0
    %436 = vmatmul.mubr.bf16.gmra.mrb[0].mxu0 %v156
    %v437 = vpop.f32.mrb[0].mxu0
    %v438 = vadd.f32 %v389, %v437
    %v439 = vpop.f32.mrb[0].mxu0
    %v440 = vpop.f32.mrb[0].mxu0
    %v441 = vadd.f32 %v392, %v440
    %v442 = vpop.f32.mrb[0].mxu0
    %443 = vmatprep.mubr.bf16.mxu0 0
    %444 = vmatmul.mubr.bf16.gmra.mrb[0].mxu0 %v157
    %v445 = vpop.f32.mrb[0].mxu0
    %v446 = vadd.f32 %v397, %v445
    %v447 = vpop.f32.mrb[0].mxu0
    %v448 = vpop.f32.mrb[0].mxu0
    %v449 = vadd.f32 %v400, %v448
    %v450 = vpop.f32.mrb[0].mxu0
    %451 = vdwg.mxu0
    %v452 = vmax.f32 %v438, 0.0
    %v453 = vmax.f32 %v441, 0.0
    %v454 = vmax.f32 %v446, 0.0
    %v455 = vmax.f32 %v449, 0.0
    %v456 = vrot.slane %v452, 7
    %v457 = vrot.slane %v453, 7
    %v458 = vrot.slane %v454, 7
    %v459 = vrot.slane %v455, 7
    %v460 = vsel %vm130, %v458, %v459
    %v461 = vsel %vm130, %v457, %v458
    %v462 = vsel %vm130, %v456, %v457
    %v463 = vsel %vm130, %v459, %v456
    %v464 = vsel %vm118, 0.0, %v463
    %v465 = vsel %vm119, 0.0, %v462
    %v466 = vsel %vm120, 0.0, %v461
    %v467 = vsel %vm121, 0.0, %v460
    %v468 = vrot.slane %v452, 1
    %v469 = vrot.slane %v453, 1
    %v470 = vrot.slane %v454, 1
    %v471 = vrot.slane %v455, 1
    %v472 = vsel %vm143, %v470, %v471
    %v473 = vsel %vm143, %v469, %v470
    %v474 = vsel %vm143, %v468, %v469
    %v475 = vsel %vm143, %v471, %v468
    %v476 = vsel %vm122, 0.0, %v474
    %v477 = vsel %vm123, 0.0, %v473
    %v478 = vsel %vm124, 0.0, %v472
    %v479 = vsel %vm125, 0.0, %v475
    %v480 = vpack.c.bf16 %v465, %v464
    %v481 = vpack.c.bf16 %v467, %v466
    %v482 = vpack.c.bf16 %v453, %v452
    %v483 = vpack.c.bf16 %v455, %v454
    %v484 = vpack.c.bf16 %v477, %v476
    %v485 = vpack.c.bf16 %v479, %v478
    %v486 = vld [vmem:[#allocation7] sm:$0xf]
    %v487 = vld [vmem:[#allocation7 + $0x4] sm:$0xf]
    %v488 = vld [vmem:[#allocation7 + $0x8] sm:$0xf]
    %v489 = vld [vmem:[#allocation7 + $0xc] sm:$0xf]
    %v490 = vld [vmem:[#allocation7 + $0x10] sm:$0xf]
    %v491 = vld [vmem:[#allocation7 + $0x14] sm:$0xf]
    %v492 = vld [vmem:[#allocation7 + $0x18] sm:$0xf]
    %v493 = vld [vmem:[#allocation7 + $0x1c] sm:$0xf]
    %v494 = vld [vmem:[#allocation7 + $0x20] sm:$0xf]
    %v495 = vld [vmem:[#allocation7 + $0x24] sm:$0xf]
    %v496 = vld [vmem:[#allocation7 + $0x28] sm:$0xf]
    %v497 = vld [vmem:[#allocation7 + $0x2c] sm:$0xf]
    %v498 = vld [vmem:[#allocation7 + $0x30] sm:$0xf]
    %v499 = vld [vmem:[#allocation7 + $0x34] sm:$0xf]
    %v500 = vld [vmem:[#allocation7 + $0x38] sm:$0xf]
    %v501 = vld [vmem:[#allocation7 + $0x3c] sm:$0xf]
    %v502 = vld [vmem:[#allocation7 + $0x40] sm:$0xf]
    %v503 = vld [vmem:[#allocation7 + $0x44] sm:$0xf]
    %v504 = vld [vmem:[#allocation7 + $0x48] sm:$0xf]
    %v505 = vld [vmem:[#allocation7 + $0x4c] sm:$0xf]
    %v506 = vld [vmem:[#allocation7 + $0x50] sm:$0xf]
    %v507 = vld [vmem:[#allocation7 + $0x54] sm:$0xf]
    %v508 = vld [vmem:[#allocation7 + $0x58] sm:$0xf]
    %v509 = vld [vmem:[#allocation7 + $0x5c] sm:$0xf]
    %v510 = vld [vmem:[#allocation7 + $0x60] sm:$0xf]
    %v511 = vld [vmem:[#allocation7 + $0x64] sm:$0xf]
    %v512 = vld [vmem:[#allocation7 + $0x68] sm:$0xf]
    %v513 = vld [vmem:[#allocation7 + $0x6c] sm:$0xf]
    %v514 = vld [vmem:[#allocation7 + $0x70] sm:$0xf]
    %v515 = vld [vmem:[#allocation7 + $0x74] sm:$0xf]
    %v516 = vld [vmem:[#allocation7 + $0x78] sm:$0xf]
    %v517 = vld [vmem:[#allocation7 + $0x7c] sm:$0xf]
    %v518 = vld [vmem:[#allocation7 + $0x80] sm:$0xf]
    %v519 = vld [vmem:[#allocation7 + $0x84] sm:$0xf]
    %v520 = vld [vmem:[#allocation7 + $0x88] sm:$0xf]
    %v521 = vld [vmem:[#allocation7 + $0x8c] sm:$0xf]
    %v522 = vld [vmem:[#allocation7 + $0x90] sm:$0xf]
    %v523 = vld [vmem:[#allocation7 + $0x94] sm:$0xf]
    %v524 = vld [vmem:[#allocation7 + $0x98] sm:$0xf]
    %v525 = vld [vmem:[#allocation7 + $0x9c] sm:$0xf]
    %v526 = vld [vmem:[#allocation7 + $0xa0] sm:$0xf]
    %v527 = vld [vmem:[#allocation7 + $0xa4] sm:$0xf]
    %v528 = vld [vmem:[#allocation7 + $0xa8] sm:$0xf]
    %v529 = vld [vmem:[#allocation7 + $0xac] sm:$0xf]
    %v530 = vld [vmem:[#allocation7 + $0xb0] sm:$0xf]
    %v531 = vld [vmem:[#allocation7 + $0xb4] sm:$0xf]
    %v532 = vld [vmem:[#allocation7 + $0xb8] sm:$0xf]
    %v533 = vld [vmem:[#allocation7 + $0xbc] sm:$0xf]
    %v534 = vlaneseq
    %v535 = vshrl.u32 %v534, 7
    %v536 = vsub.s32 1, %v535
    %v537 = vrot.slane %v64, %v536
    %v586 = vunpack.c.l.b16 %v486
    %v587 = vunpack.c.l.b16 %v487
    %v588 = vunpack.c.l.b16 %v488
    %v589 = vunpack.c.l.b16 %v489
    %v590 = vunpack.c.l.b16 %v490
    %v591 = vunpack.c.l.b16 %v491
    %v592 = vunpack.c.l.b16 %v492
    %v593 = vunpack.c.l.b16 %v493
    %v594 = vunpack.c.l.b16 %v494
    %v595 = vunpack.c.l.b16 %v495
    %v596 = vunpack.c.l.b16 %v496
    %v597 = vunpack.c.l.b16 %v497
    %v598 = vunpack.c.l.b16 %v498
    %v599 = vunpack.c.l.b16 %v499
    %v600 = vunpack.c.l.b16 %v500
    %v601 = vunpack.c.l.b16 %v501
    %v602 = vunpack.c.l.b16 %v502
    %v603 = vunpack.c.l.b16 %v503
    %v604 = vunpack.c.l.b16 %v504
    %v605 = vunpack.c.l.b16 %v505
    %v606 = vunpack.c.l.b16 %v506
    %v607 = vunpack.c.l.b16 %v507
    %v608 = vunpack.c.l.b16 %v508
    %v609 = vunpack.c.l.b16 %v509
    %v610 = vunpack.c.l.b16 %v510
    %v611 = vunpack.c.l.b16 %v511
    %v612 = vunpack.c.l.b16 %v512
    %v613 = vunpack.c.l.b16 %v513
    %v614 = vunpack.c.l.b16 %v514
    %v615 = vunpack.c.l.b16 %v515
    %v616 = vunpack.c.l.b16 %v516
    %v617 = vunpack.c.l.b16 %v517
    %v618 = vunpack.c.l.b16 %v518
    %v619 = vunpack.c.l.b16 %v519
    %v620 = vunpack.c.l.b16 %v520
    %v621 = vunpack.c.l.b16 %v521
    %v622 = vunpack.c.l.b16 %v522
    %v623 = vunpack.c.l.b16 %v523
    %v624 = vunpack.c.l.b16 %v524
    %v625 = vunpack.c.l.b16 %v525
    %v626 = vunpack.c.l.b16 %v526
    %v627 = vunpack.c.l.b16 %v527
    %v628 = vunpack.c.l.b16 %v528
    %v629 = vunpack.c.l.b16 %v529
    %v630 = vunpack.c.l.b16 %v530
    %v631 = vunpack.c.l.b16 %v531
    %v632 = vunpack.c.l.b16 %v532
    %v633 = vunpack.c.l.b16 %v533
    %v634 = vpack.c.b16 %v587, %v586
    %v635 = vpack.c.b16 %v589, %v588
    %v636 = vpack.c.b16 %v591, %v590
    %v637 = vpack.c.b16 %v593, %v592
    %v638 = vpack.c.b16 %v595, %v594
    %v639 = vpack.c.b16 %v597, %v596
    %v640 = vpack.c.b16 %v599, %v598
    %v641 = vpack.c.b16 %v601, %v600
    %v642 = vpack.c.b16 %v603, %v602
    %v643 = vpack.c.b16 %v605, %v604
    %v644 = vpack.c.b16 %v607, %v606
    %v645 = vpack.c.b16 %v609, %v608
    %v646 = vpack.c.b16 %v611, %v610
    %v647 = vpack.c.b16 %v613, %v612
    %v648 = vpack.c.b16 %v615, %v614
    %v649 = vpack.c.b16 %v617, %v616
    %v650 = vpack.c.b16 %v619, %v618
    %v651 = vpack.c.b16 %v621, %v620
    %v652 = vpack.c.b16 %v623, %v622
    %v653 = vpack.c.b16 %v625, %v624
    %v654 = vpack.c.b16 %v627, %v626
    %v655 = vpack.c.b16 %v629, %v628
    %v656 = vpack.c.b16 %v631, %v630
    %v657 = vpack.c.b16 %v633, %v632
    %682 = vmatprep.subr.bf16.mxu0 0
    %683 = vmatpush1.bf16.msra.mxu0 %v634
    %684 = vmatprep.subr.bf16.mxu0 0
    %685 = vmatpush1.bf16.msra.mxu0 %v635
    %686 = vmatprep.subr.bf16.mxu0 0
    %687 = vmatpush1.bf16.msra.mxu0 %v636
    %688 = vmatprep.subr.bf16.mxu0 0
    %689 = vmatpush1.bf16.msra.mxu0 %v637
    %690 = vmatprep.subr.bf16.mxu0 0
    %691 = vmatpush1.bf16.msra.mxu0 %v638
    %692 = vmatprep.subr.bf16.mxu0 0
    %693 = vmatpush1.bf16.msra.mxu0 %v639
    %694 = vmatprep.subr.bf16.mxu0 0
    %695 = vmatpush1.bf16.msra.mxu0 %v640
    %696 = vmatprep.subr.bf16.mxu0 0
    %697 = vmatpush1.bf16.msra.mxu0 %v641
    %698 = vmatprep.subr.bf16.mxu0 0
    %699 = vmatpush1.bf16.msra.mxu0 %v642
    %700 = vmatprep.subr.bf16.mxu0 0
    %701 = vmatpush1.bf16.msra.mxu0 %v643
    %702 = vmatprep.subr.bf16.mxu0 0
    %703 = vmatpush1.bf16.msra.mxu0 %v644
    %704 = vmatprep.subr.bf16.mxu0 0
    %705 = vmatpush1.bf16.msra.mxu0 %v645
    %706 = vmatprep.subr.bf16.mxu0 0
    %707 = vmatpush1.bf16.msra.mxu0 %v646
    %708 = vmatprep.subr.bf16.mxu0 0
    %709 = vmatpush1.bf16.msra.mxu0 %v647
    %710 = vmatprep.subr.bf16.mxu0 0
    %711 = vmatpush1.bf16.msra.mxu0 %v648
    %712 = vmatprep.subr.bf16.mxu0 0
    %713 = vmatpush1.bf16.msra.mxu0 %v649
    %714 = vmatprep.mubr.bf16.mxu0 %v482
    %715 = vmatmul.mubr.bf16.gmra.mrb[0].mxu0 %v480
    %v716 = vpop.f32.mrb[0].mxu0
    %v717 = vadd.f32 %v537, %v716
    %v718 = vpop.f32.mrb[0].mxu0
    %v719 = vpop.f32.mrb[0].mxu0
    %v720 = vadd.f32 %v537, %v719
    %v721 = vpop.f32.mrb[0].mxu0
    %722 = vmatprep.mubr.bf16.mxu0 %v483
    %723 = vmatmul.mubr.bf16.gmra.mrb[0].mxu0 %v481
    %v724 = vpop.f32.mrb[0].mxu0
    %v725 = vadd.f32 %v537, %v724
    %v726 = vpop.f32.mrb[0].mxu0
    %v727 = vpop.f32.mrb[0].mxu0
    %v728 = vadd.f32 %v537, %v727
    %v729 = vpop.f32.mrb[0].mxu0
    %730 = vdwg.mxu0
    %731 = vmatprep.subr.bf16.mxu0 0
    %732 = vmatpush1.bf16.msra.mxu0 %v650
    %733 = vmatprep.subr.bf16.mxu0 0
    %734 = vmatpush1.bf16.msra.mxu0 %v651
    %735 = vmatprep.subr.bf16.mxu0 0
    %736 = vmatpush1.bf16.msra.mxu0 %v652
    %737 = vmatprep.subr.bf16.mxu0 0
    %738 = vmatpush1.bf16.msra.mxu0 %v653
    %739 = vmatprep.subr.bf16.mxu0 0
    %740 = vmatpush1.bf16.msra.mxu0 %v654
    %741 = vmatprep.subr.bf16.mxu0 0
    %742 = vmatpush1.bf16.msra.mxu0 %v655
    %743 = vmatprep.subr.bf16.mxu0 0
    %744 = vmatpush1.bf16.msra.mxu0 %v656
    %745 = vmatprep.subr.bf16.mxu0 0
    %746 = vmatpush1.bf16.msra.mxu0 %v657
    %747 = vmatprep.subr.bf16.mxu0 0
    %748 = vmatpush1.bf16.msra.mxu0 0
    %749 = vmatprep.subr.bf16.mxu0 0
    %750 = vmatpush1.bf16.msra.mxu0 0
    %751 = vmatprep.subr.bf16.mxu0 0
    %752 = vmatpush1.bf16.msra.mxu0 0
    %753 = vmatprep.subr.bf16.mxu0 0
    %754 = vmatpush1.bf16.msra.mxu0 0
    %755 = vmatprep.subr.bf16.mxu0 0
    %756 = vmatpush1.bf16.msra.mxu0 0
    %757 = vmatprep.subr.bf16.mxu0 0
    %758 = vmatpush1.bf16.msra.mxu0 0
    %759 = vmatprep.subr.bf16.mxu0 0
    %760 = vmatpush1.bf16.msra.mxu0 0
    %761 = vmatprep.subr.bf16.mxu0 0
    %762 = vmatpush1.bf16.msra.mxu0 0
    %763 = vmatprep.mubr.bf16.mxu0 0
    %764 = vmatmul.mubr.bf16.gmra.mrb[0].mxu0 %v484
    %v765 = vpop.f32.mrb[0].mxu0
    %v766 = vadd.f32 %v717, %v765
    %v767 = vpop.f32.mrb[0].mxu0
    %v768 = vpop.f32.mrb[0].mxu0
    %v769 = vadd.f32 %v720, %v768
    %v770 = vpop.f32.mrb[0].mxu0
    %771 = vmatprep.mubr.bf16.mxu0 0
    %772 = vmatmul.mubr.bf16.gmra.mrb[0].mxu0 %v485
    %v773 = vpop.f32.mrb[0].mxu0
    %v774 = vadd.f32 %v725, %v773
    %v775 = vpop.f32.mrb[0].mxu0
    %v776 = vpop.f32.mrb[0].mxu0
    %v777 = vadd.f32 %v728, %v776
    %v778 = vpop.f32.mrb[0].mxu0
    %779 = vdwg.mxu0
    %v780 = vadd.f32 %v766, %v60
    %v781 = vadd.f32 %v769, %v61
    %v782 = vadd.f32 %v774, %v62
    %v783 = vadd.f32 %v777, %v63
    %v784 = vmax.f32 %v780, 0.0
    %v785 = vmax.f32 %v781, 0.0
    %v786 = vmax.f32 %v782, 0.0
    %v787 = vmax.f32 %v783, 0.0
    %788 = vst [vmem:[#allocation8] sm:$0xff] %v784
    %789 = vst [vmem:[#allocation8 + $0x8] sm:$0xff] %v785
    %790 = vst [vmem:[#allocation8 + $0x10] sm:$0xff] %v786
    %791 = vst [vmem:[#allocation8 + $0x18] sm:$0xff] %v787
    // Predicated region
    $region30: #{tpu_custom_call.1} parent=1 // pred_check
      _
    $region31: #{tpu_custom_call.1} parent=1 // pred_check_branch
      %793 = sbr.rel (0) target = $region33
    $region32: #{tpu_custom_call.1} parent=1 // pred_region
      %s795 = ssub.s32 512, 512
      %796 = vsyncadd [#allocation4], %s795
      %s797 = sshll.u32 [#allocation8], 4
      %s798 = int_to_ptr.vmem [resolvable:$true] %s797
      %803 = dma.vmem_to_hbm [thread:$0]  %s798, 512, %s4, [#allocation4], 128, 128, 8
    $region33: #{tpu_custom_call.1} parent=1 // pred_fallthru
      _
    // Predicated region
    $region34: #{tpu_custom_call.1} parent=1 // pred_check
      _
    $region35: #{tpu_custom_call.1} parent=1 // pred_check_branch
      %805 = sbr.rel (0) target = $region37
    $region36: #{tpu_custom_call.1} parent=1 // pred_region
      %806 = dma.done [#allocation4], 512
    $region37: #{tpu_custom_call.1} parent=1 // pred_fallthru
      _
    %807 = vsyncpa [#allocation3], 1
    %808 = vsyncpa [#allocation6], 1
    %809 = vsyncpa [#allocation4], 1

</llo_original>
